<compile_context>
chip_gen: v7x
topology: tpu7x:2x2x1
jax: 0.10.0
libtpu: 0.0.40
codegen_flags: <defaults>
</compile_context>

<pallas_src>
import jax
import jax.numpy as jnp
from jax import lax
from jax.experimental import pallas as pl
from jax.experimental.pallas import tpu as pltpu


def _round_up(x, m):
    return (x + m - 1) // m * m


def _mlp_kernel(x_ref, w1_ref, b1_ref, w2_ref, b2_ref, o_ref):
    # fc1: bf16 MXU matmul (cast in-register), f32 accumulation; bias/relu in f32.
    x = x_ref[...].astype(jnp.bfloat16)
    w1 = w1_ref[...].astype(jnp.bfloat16)
    h = jnp.dot(x, w1, preferred_element_type=jnp.float32)
    h = jnp.maximum(h + b1_ref[...], 0.0)

    # fc2: lane-dense, padded to 128 output columns (only cols 0/1 are real; pads zero).
    z = jnp.dot(h.astype(jnp.bfloat16), w2_ref[...].astype(jnp.bfloat16),
                preferred_element_type=jnp.float32)
    z = jnp.maximum(z + b2_ref[...], 0.0)

    # 2-class closed-form log_softmax over columns 0/1 (pure VPU/EUP, no XLU):
    #   log_softmax = [-softplus(z1 - z0), -softplus(z0 - z1)]
    d = z[:, 1:2] - z[:, 0:1]                                            # (tb, 1)
    sp_pos = jnp.maximum(d, 0.0) + jnp.log(1.0 + jnp.exp(-jnp.abs(d)))   # softplus(d)
    sp_neg = sp_pos - d                                                  # softplus(-d)

    # Place results lane-dense: col 0 = -softplus(d), col 1 = -softplus(-d), rest 0.
    col = lax.broadcasted_iota(jnp.int32, o_ref.shape, 1)
    out = jnp.where(col == 0, -sp_pos, jnp.where(col == 1, -sp_neg, 0.0))
    o_ref[...] = out.astype(o_ref.dtype)


def net_forward(x, w1, b1, w2, b2, *, tile_b=512):
    """Net forward: log_softmax(relu(fc2(relu(fc1(x)))), dim=1).

    x: (B, F) f32; w1: (F, F); b1: (1, F); w2: (F, 2); b2: (1, 2). Returns (B, 2) f32.
    """
    B, F = x.shape
    n_cls = w2.shape[1]
    N_pad = 128  # lane-dense output slab (unmasked stores)

    # Batch tiling: single full-extent tile when B <= tile_b (no padding pass over x);
    # otherwise tile_b rows per grid step (tile_b % 8 == 0) with a zero-padded tail.
    if B <= tile_b:
        tb, B_pad = B, B
    else:
        tb = tile_b
        B_pad = _round_up(B, tb)
    x_p = x if B_pad == B else jnp.pad(x, ((0, B_pad - B), (0, 0)))

    # Tiny one-time parameter prep: pad fc2 to 128 output columns. Zero pads are
    # transparent through matmul + bias + relu; only cols 0/1 carry real logits.
    w2_p = jnp.pad(w2, ((0, 0), (0, N_pad - n_cls)))
    b2_p = jnp.pad(b2, ((0, 0), (0, N_pad - n_cls)))

    # NOTE: whole-weight-resident tiling is fine up to fc_dim of a few thousand; for
    # fc_dim >= ~2048 tile w1's K/N dims and raise vmem_limit_bytes (halve tiles on
    # v7x's 64 MiB VMEM).
    out_p = pl.pallas_call(
        _mlp_kernel,
        out_shape=jax.ShapeDtypeStruct((B_pad, N_pad), jnp.float32),
        grid=(B_pad // tb,),
        in_specs=[
            pl.BlockSpec((tb, F), lambda i: (i, 0)),      # x tile (pipelined over batch)
            pl.BlockSpec((F, F), lambda i: (0, 0)),       # w1 resident (fetched once)
            pl.BlockSpec((1, F), lambda i: (0, 0)),       # b1 resident
            pl.BlockSpec((F, N_pad), lambda i: (0, 0)),   # w2 resident (col-padded)
            pl.BlockSpec((1, N_pad), lambda i: (0, 0)),   # b2 resident (col-padded)
        ],
        out_specs=pl.BlockSpec((tb, N_pad), lambda i: (i, 0)),
        compiler_params=pltpu.CompilerParams(
            dimension_semantics=("parallel",),  # batch tiles shard across v7x's 2 TCs
        ),
    )(x_p, w1, b1, w2_p, b2_p)
    return out_p[:B, :n_cls]


def init_params(key, fc_dim):
    """Deterministic init mimicking nn.Linear default (uniform +/- 1/sqrt(fan_in))."""
    k1, k2, k3, k4 = jax.random.split(key, 4)
    bound1 = 1.0 / jnp.sqrt(fc_dim)
    # Stored pre-transposed: (in_features, out_features)
    w1 = jax.random.uniform(k1, (fc_dim, fc_dim), jnp.float32, -bound1, bound1)
    b1 = jax.random.uniform(k2, (1, fc_dim), jnp.float32, -bound1, bound1)
    w2 = jax.random.uniform(k3, (fc_dim, 2), jnp.float32, -bound1, bound1)
    b2 = jax.random.uniform(k4, (1, 2), jnp.float32, -bound1, bound1)
    return w1, b1, w2, b2


if __name__ == "__main__":
    fc_dim = 32
    batch = 8

    key = jax.random.PRNGKey(0)
    kx, kp = jax.random.split(key)
    x = jax.random.normal(kx, (batch, fc_dim), jnp.float32)
    w1, b1, w2, b2 = init_params(kp, fc_dim)

    out = jax.block_until_ready(net_forward(x, w1, b1, w2, b2))
    assert out.shape == (batch, 2)

    # Tight check vs bf16-matched pure-JAX reference (same rounding as the kernel).
    f32 = lambda a: a.astype(jnp.bfloat16).astype(jnp.float32)
    h_ref = jnp.maximum(f32(x) @ f32(w1) + b1, 0.0)
    z_ref = jnp.maximum(f32(h_ref) @ f32(w2) + b2, 0.0)
    ref_bf16 = jax.nn.log_softmax(z_ref, axis=1)
    assert jnp.allclose(out, ref_bf16, atol=2e-3, rtol=2e-3), "mismatch vs bf16-matched reference"

    # Loose sanity check vs full-f32 reference.
    h_f = jnp.maximum(x @ w1 + b1, 0.0)
    z_f = jnp.maximum(h_f @ w2 + b2, 0.0)
    ref_f32 = jax.nn.log_softmax(z_f, axis=1)
    assert jnp.allclose(out, ref_f32, atol=5e-2), "mismatch vs f32 reference"

    print("KERNEL_OK")
</pallas_src>

<mosaic_0001>
module attributes {stable_mosaic.version = 11 : i64} {
  func.func @_mlp_kernel(%arg0: i32, %arg1: memref<8x32xf32, #tpu.memory_space<vmem>>, %arg2: memref<32x32xf32, #tpu.memory_space<vmem>>, %arg3: memref<1x32xf32, #tpu.memory_space<vmem>>, %arg4: memref<32x128xf32, #tpu.memory_space<vmem>>, %arg5: memref<1x128xf32, #tpu.memory_space<vmem>>, %arg6: memref<8x128xf32, #tpu.memory_space<vmem>>) attributes {dimension_semantics = [#tpu.dimension_semantics<parallel>], iteration_bounds = array<i64: 1>, scalar_prefetch = 0 : i64, scratch_operands = 0 : i64, tpu.core_type = #tpu.core_type<tc>, window_params = [{transform_indices = @transform_0, window_bounds = array<i64: 8, 32>}, {pipeline_mode = #tpu.pipeline_mode<synchronous>, transform_indices = @transform_1, window_bounds = array<i64: 32, 32>}, {pipeline_mode = #tpu.pipeline_mode<synchronous>, transform_indices = @transform_2, window_bounds = array<i64: 1, 32>}, {pipeline_mode = #tpu.pipeline_mode<synchronous>, transform_indices = @transform_3, window_bounds = array<i64: 32, 128>}, {pipeline_mode = #tpu.pipeline_mode<synchronous>, transform_indices = @transform_4, window_bounds = array<i64: 1, 128>}, {transform_indices = @transform_5, window_bounds = array<i64: 8, 128>}]} {
    %c0 = arith.constant 0 : index
    %c0_0 = arith.constant 0 : index
    %0 = vector.load %arg1[%c0, %c0_0] : memref<8x32xf32, #tpu.memory_space<vmem>>, vector<8x32xf32>
    %1 = arith.truncf %0 : vector<8x32xf32> to vector<8x32xbf16>
    %c0_1 = arith.constant 0 : index
    %c0_2 = arith.constant 0 : index
    %2 = vector.load %arg2[%c0_1, %c0_2] : memref<32x32xf32, #tpu.memory_space<vmem>>, vector<32x32xf32>
    %3 = arith.truncf %2 : vector<32x32xf32> to vector<32x32xbf16>
    %cst = arith.constant dense<0.000000e+00> : vector<8x32xf32>
    %4 = tpu.matmul %1, %3, %cst {dimension_numbers = #tpu.dot_dimension_numbers<[1], [0], [0], [1], [0, 0, 1, 1], [], []>} : vector<8x32xbf16>, vector<32x32xbf16>, vector<8x32xf32> -> vector<8x32xf32>
    %c0_3 = arith.constant 0 : index
    %c0_4 = arith.constant 0 : index
    %5 = vector.load %arg3[%c0_3, %c0_4] : memref<1x32xf32, #tpu.memory_space<vmem>>, vector<1x32xf32>
    %6 = vector.broadcast %5 : vector<1x32xf32> to vector<8x32xf32>
    %7 = arith.addf %4, %6 : vector<8x32xf32>
    %cst_5 = arith.constant 0.000000e+00 : f32
    %8 = vector.broadcast %cst_5 : f32 to vector<8x32xf32>
    %9 = arith.maximumf %7, %8 : vector<8x32xf32>
    %10 = arith.truncf %9 : vector<8x32xf32> to vector<8x32xbf16>
    %c0_6 = arith.constant 0 : index
    %c0_7 = arith.constant 0 : index
    %11 = vector.load %arg4[%c0_6, %c0_7] : memref<32x128xf32, #tpu.memory_space<vmem>>, vector<32x128xf32>
    %12 = arith.truncf %11 : vector<32x128xf32> to vector<32x128xbf16>
    %cst_8 = arith.constant dense<0.000000e+00> : vector<8x128xf32>
    %13 = tpu.matmul %10, %12, %cst_8 {dimension_numbers = #tpu.dot_dimension_numbers<[1], [0], [0], [1], [0, 0, 1, 1], [], []>} : vector<8x32xbf16>, vector<32x128xbf16>, vector<8x128xf32> -> vector<8x128xf32>
    %c0_9 = arith.constant 0 : index
    %c0_10 = arith.constant 0 : index
    %14 = vector.load %arg5[%c0_9, %c0_10] : memref<1x128xf32, #tpu.memory_space<vmem>>, vector<1x128xf32>
    %15 = vector.broadcast %14 : vector<1x128xf32> to vector<8x128xf32>
    %16 = arith.addf %13, %15 : vector<8x128xf32>
    %cst_11 = arith.constant 0.000000e+00 : f32
    %17 = vector.broadcast %cst_11 : f32 to vector<8x128xf32>
    %18 = arith.maximumf %16, %17 : vector<8x128xf32>
    %19 = vector.extract_strided_slice %18 {offsets = [0, 1], sizes = [8, 1], strides = [1, 1]} : vector<8x128xf32> to vector<8x1xf32>
    %20 = vector.extract_strided_slice %18 {offsets = [0, 0], sizes = [8, 1], strides = [1, 1]} : vector<8x128xf32> to vector<8x1xf32>
    %21 = arith.subf %19, %20 : vector<8x1xf32>
    %cst_12 = arith.constant 0.000000e+00 : f32
    %22 = vector.broadcast %cst_12 : f32 to vector<8x1xf32>
    %23 = arith.maximumf %21, %22 : vector<8x1xf32>
    %24 = math.absf %21 : vector<8x1xf32>
    %cst_13 = arith.constant 0.000000e+00 : f32
    %25 = vector.broadcast %cst_13 : f32 to vector<8x1xf32>
    %26 = arith.subf %25, %24 : vector<8x1xf32>
    %27 = math.exp %26 : vector<8x1xf32>
    %cst_14 = arith.constant 1.000000e+00 : f32
    %28 = vector.broadcast %cst_14 : f32 to vector<8x1xf32>
    %29 = arith.addf %28, %27 : vector<8x1xf32>
    %30 = math.log %29 : vector<8x1xf32>
    %31 = arith.addf %23, %30 : vector<8x1xf32>
    %32 = arith.subf %31, %21 : vector<8x1xf32>
    %33 = tpu.iota {dimensions = array<i32: 1>} : vector<8x128xi32>
    %c0_i32 = arith.constant 0 : i32
    %34 = vector.broadcast %c0_i32 : i32 to vector<8x128xi32>
    %35 = arith.cmpi eq, %33, %34 : vector<8x128xi32>
    %cst_15 = arith.constant 0.000000e+00 : f32
    %36 = vector.broadcast %cst_15 : f32 to vector<8x1xf32>
    %37 = arith.subf %36, %31 : vector<8x1xf32>
    %c1_i32 = arith.constant 1 : i32
    %38 = vector.broadcast %c1_i32 : i32 to vector<8x128xi32>
    %39 = arith.cmpi eq, %33, %38 : vector<8x128xi32>
    %cst_16 = arith.constant 0.000000e+00 : f32
    %40 = vector.broadcast %cst_16 : f32 to vector<8x1xf32>
    %41 = arith.subf %40, %32 : vector<8x1xf32>
    %cst_17 = arith.constant 0.000000e+00 : f32
    %42 = vector.shape_cast %41 : vector<8x1xf32> to vector<8x1xf32>
    %43 = vector.broadcast %42 : vector<8x1xf32> to vector<8x128xf32>
    %44 = vector.broadcast %cst_17 : f32 to vector<8x128xf32>
    %45 = arith.select %39, %43, %44 : vector<8x128xi1>, vector<8x128xf32>
    %46 = vector.shape_cast %37 : vector<8x1xf32> to vector<8x1xf32>
    %47 = vector.broadcast %46 : vector<8x1xf32> to vector<8x128xf32>
    %48 = arith.select %35, %47, %45 : vector<8x128xi1>, vector<8x128xf32>
    %c0_18 = arith.constant 0 : index
    %c0_19 = arith.constant 0 : index
    %49 = vector.load %arg6[%c0_18, %c0_19] : memref<8x128xf32, #tpu.memory_space<vmem>>, vector<8x128xf32>
    tpu.vector_store %arg6[%c0_18, %c0_19], %48 {strides = array<i32>} : memref<8x128xf32, #tpu.memory_space<vmem>>, vector<8x128xf32>,
    return
  }
  func.func @transform_0(%arg0: i32) -> (i32, i32) {
    %c0_i32 = arith.constant 0 : i32
    %c0_i32_0 = arith.constant 0 : i32
    return %arg0, %c0_i32 : i32, i32
  }
  func.func @transform_1(%arg0: i32) -> (i32, i32) {
    %c0_i32 = arith.constant 0 : i32
    %c0_i32_0 = arith.constant 0 : i32
    %c0_i32_1 = arith.constant 0 : i32
    return %c0_i32, %c0_i32_0 : i32, i32
  }
  func.func @transform_2(%arg0: i32) -> (i32, i32) {
    %c0_i32 = arith.constant 0 : i32
    %c0_i32_0 = arith.constant 0 : i32
    %c0_i32_1 = arith.constant 0 : i32
    return %c0_i32, %c0_i32_0 : i32, i32
  }
  func.func @transform_3(%arg0: i32) -> (i32, i32) {
    %c0_i32 = arith.constant 0 : i32
    %c0_i32_0 = arith.constant 0 : i32
    %c0_i32_1 = arith.constant 0 : i32
    return %c0_i32, %c0_i32_0 : i32, i32
  }
  func.func @transform_4(%arg0: i32) -> (i32, i32) {
    %c0_i32 = arith.constant 0 : i32
    %c0_i32_0 = arith.constant 0 : i32
    %c0_i32_1 = arith.constant 0 : i32
    return %c0_i32, %c0_i32_0 : i32, i32
  }
  func.func @transform_5(%arg0: i32) -> (i32, i32) {
    %c0_i32 = arith.constant 0 : i32
    %c0_i32_0 = arith.constant 0 : i32
    return %arg0, %c0_i32 : i32, i32
  }
}

</mosaic_0001>

<llo_original>
// kernel: tpu_custom_call.1
$region0: #{tpu_custom_call.1}
  #allocation0 [shape = 'u32[]', space=smem, size = 0x4, offset = 0x4, fixed_abs, tag = 'smem constant byte address 0x4 - core index']
  #allocation1 [shape = 'u32[144,128]{1,0:T(1,128)}', space=vmem, size = 0x12000, scoped, tag = 'internal scratch']
  %s0 = inlined_call_operand.hbm [shape: f32[8,32], index: 0, kind: input, shape index: {}]
  %s1 = inlined_call_operand.hbm [shape: f32[32,32], index: 1, kind: input, shape index: {}]
  %s2 = inlined_call_operand.vmem [shape: f32[1,32], index: 2, kind: input, shape index: {}]
  %s3 = inlined_call_operand.hbm [shape: f32[32,128], index: 3, kind: input, shape index: {}]
  %s4 = inlined_call_operand.vmem [shape: f32[1,128], index: 4, kind: input, shape index: {}]
  %s5 = inlined_call_operand.hbm [shape: f32[8,128], index: 5, kind: output, shape index: {}]
  %s6 = sld [smem:[#allocation0]]
  $region42: #{tpu_custom_call.1} parent=0
    _
  %s8 = ssub.s32 1, %s6
  %s9 = scalar_select 0, %s8, %s6
  $region1: #{tpu_custom_call.1} parent=0
    #allocation2 [shape = 'u8[4096]{0}', space=vmem, size = 0x1000, scoped, tag = 'input window, operand 0, single buffered']
    #allocation3 [shape = 's32[1]{0}', space=sflag, size = 0x4, scoped, tag = 'scoped memory for tpu_custom_call.1']
    #allocation4 [shape = 's32[1]{0}', space=sflag, size = 0x4, scoped, tag = 'scoped memory for tpu_custom_call.1']
    #allocation5 [shape = 'u8[16384]{0}', space=vmem, size = 0x4000, scoped, tag = 'input window, operand 1, single buffered']
    #allocation6 [shape = 's32[1]{0}', space=sflag, size = 0x4, scoped, tag = 'scoped memory for tpu_custom_call.1']
    #allocation7 [shape = 'u8[16384]{0}', space=vmem, size = 0x4000, scoped, tag = 'input window, operand 3, single buffered']
    #allocation8 [shape = 'u8[4096]{0}', space=vmem, size = 0x1000, scoped, tag = 'output window, operand 0, single buffered']
    %10 = vsyncpa [#allocation3], 0
    %11 = vsyncpa [#allocation6], 0
    %12 = vsyncpa [#allocation4], 0
    // Predicated region
    $region2: #{tpu_custom_call.1} parent=1 // pred_check
      _
    $region3: #{tpu_custom_call.1} parent=1 // pred_check_branch
      %14 = sbr.rel (0) target = $region5
    $region4: #{tpu_custom_call.1} parent=1 // pred_region
      %s16 = ssub.s32 128, 128
      %17 = vsyncadd [#allocation3], %s16
      %s19 = sshll.u32 [#allocation2], 4
      %s20 = int_to_ptr.vmem [resolvable:$true] %s19
      %22 = dma.hbm_to_vmem [thread:$0]  %s0, 128, %s20, [#allocation3]
    $region5: #{tpu_custom_call.1} parent=1 // pred_fallthru
      _
    // Predicated region
    $region6: #{tpu_custom_call.1} parent=1 // pred_check
      _
    $region7: #{tpu_custom_call.1} parent=1 // pred_check_branch
      %24 = sbr.rel (0) target = $region9
    $region8: #{tpu_custom_call.1} parent=1 // pred_region
      %s26 = ssub.s32 512, 512
      %27 = vsyncadd [#allocation6], %s26
      %s28 = sshll.u32 [#allocation5], 4
      %s29 = int_to_ptr.vmem [resolvable:$true] %s28
      %34 = dma.hbm_to_vmem [thread:$0]  %s1, 512, %s29, [#allocation6], 128, 128, 8
    $region9: #{tpu_custom_call.1} parent=1 // pred_fallthru
      _
    // Predicated region
    $region10: #{tpu_custom_call.1} parent=1 // pred_check
      _
    $region11: #{tpu_custom_call.1} parent=1 // pred_check_branch
      %36 = sbr.rel (0) target = $region13
    $region12: #{tpu_custom_call.1} parent=1 // pred_region
      _
    $region13: #{tpu_custom_call.1} parent=1 // pred_fallthru
      _
    // Predicated region
    $region14: #{tpu_custom_call.1} parent=1 // pred_check
      _
    $region15: #{tpu_custom_call.1} parent=1 // pred_check_branch
      %38 = sbr.rel (0) target = $region17
    $region16: #{tpu_custom_call.1} parent=1 // pred_region
      %s40 = ssub.s32 512, 512
      %41 = vsyncadd [#allocation6], %s40
      %s42 = sshll.u32 [#allocation7], 4
      %s43 = int_to_ptr.vmem [resolvable:$true] %s42
      %48 = dma.hbm_to_vmem [thread:$0]  %s3, 512, %s43, [#allocation6], 128, 128, 8
    $region17: #{tpu_custom_call.1} parent=1 // pred_fallthru
      _
    // Predicated region
    $region18: #{tpu_custom_call.1} parent=1 // pred_check
      _
    $region19: #{tpu_custom_call.1} parent=1 // pred_check_branch
      %50 = sbr.rel (0) target = $region21
    $region20: #{tpu_custom_call.1} parent=1 // pred_region
      _
    $region21: #{tpu_custom_call.1} parent=1 // pred_fallthru
      _
    // Predicated region
    $region22: #{tpu_custom_call.1} parent=1 // pred_check
      _
    $region23: #{tpu_custom_call.1} parent=1 // pred_check_branch
      %52 = sbr.rel (0) target = $region25
    $region24: #{tpu_custom_call.1} parent=1 // pred_region
      %53 = dma.done [#allocation3], 128
    $region25: #{tpu_custom_call.1} parent=1 // pred_fallthru
      _
    // Predicated region
    $region26: #{tpu_custom_call.1} parent=1 // pred_check
      _
    $region27: #{tpu_custom_call.1} parent=1 // pred_check_branch
      %55 = sbr.rel (0) target = $region29
    $region28: #{tpu_custom_call.1} parent=1 // pred_region
      %56 = dma.done [#allocation6], 512
    $region29: #{tpu_custom_call.1} parent=1 // pred_fallthru
      _
    // Predicated region
    $region30: #{tpu_custom_call.1} parent=1 // pred_check
      _
    $region31: #{tpu_custom_call.1} parent=1 // pred_check_branch
      %58 = sbr.rel (0) target = $region33
    $region32: #{tpu_custom_call.1} parent=1 // pred_region
      %59 = dma.done [#allocation6], 512
    $region33: #{tpu_custom_call.1} parent=1 // pred_fallthru
      _
    %v61 = vld [vmem:[#allocation2] sm:$0xff]
    %v62 = vpack.c.bf16 %v61, %v61
    %v63 = vld [vmem:[#allocation5] sm:$0xff]
    %v64 = vld [vmem:[#allocation5 + $0x8] sm:$0xff]
    %v65 = vld [vmem:[#allocation5 + $0x10] sm:$0xff]
    %v66 = vld [vmem:[#allocation5 + $0x18] sm:$0xff]
    %v67 = vpack.c.bf16 %v64, %v63
    %v68 = vpack.c.bf16 %v66, %v65
    %v69 = vld [vmem:[%s2] sm:$0x1]
    %v71 = vlaneseq
    %v72 = vshrl.u32 %v71, 7
    %v73 = vsub.s32 0, %v72
    %v74 = vrot.slane %v69, %v73
    %vm76 = vcmask 261120
    %v78 = vsel %vm76, %v62, 0
    %80 = vmatprep.subr.bf16.mxu0 0
    %81 = vmatpush1.bf16.msra.mxu0 %v67
    %82 = vmatprep.subr.bf16.mxu0 0
    %83 = vmatpush1.bf16.msra.mxu0 %v68
    %84 = vmatprep.subr.bf16.mxu0 0
    %85 = vmatpush1.bf16.msra.mxu0 0
    %86 = vmatprep.subr.bf16.mxu0 0
    %87 = vmatpush1.bf16.msra.mxu0 0
    %88 = vmatprep.subr.bf16.mxu0 0
    %89 = vmatpush1.bf16.msra.mxu0 0
    %90 = vmatprep.subr.bf16.mxu0 0
    %91 = vmatpush1.bf16.msra.mxu0 0
    %92 = vmatprep.subr.bf16.mxu0 0
    %93 = vmatpush1.bf16.msra.mxu0 0
    %94 = vmatprep.subr.bf16.mxu0 0
    %95 = vmatpush1.bf16.msra.mxu0 0
    %96 = vmatprep.subr.bf16.mxu0 0
    %97 = vmatpush1.bf16.msra.mxu0 0
    %98 = vmatprep.subr.bf16.mxu0 0
    %99 = vmatpush1.bf16.msra.mxu0 0
    %100 = vmatprep.subr.bf16.mxu0 0
    %101 = vmatpush1.bf16.msra.mxu0 0
    %102 = vmatprep.subr.bf16.mxu0 0
    %103 = vmatpush1.bf16.msra.mxu0 0
    %104 = vmatprep.subr.bf16.mxu0 0
    %105 = vmatpush1.bf16.msra.mxu0 0
    %106 = vmatprep.subr.bf16.mxu0 0
    %107 = vmatpush1.bf16.msra.mxu0 0
    %108 = vmatprep.subr.bf16.mxu0 0
    %109 = vmatpush1.bf16.msra.mxu0 0
    %110 = vmatprep.subr.bf16.mxu0 0
    %111 = vmatpush1.bf16.msra.mxu0 0
    %112 = vmatprep.mubr.bf16.mxu0 0
    %113 = vmatmul.mubr.bf16.gmra.mrb[0].mxu0 %v78
    %v114 = vpop.f32.mrb[0].mxu0
    %v115 = vadd.f32 %v74, %v114
    %v116 = vpop.f32.mrb[0].mxu0
    %v117 = vpop.f32.mrb[0].mxu0
    %v118 = vpop.f32.mrb[0].mxu0
    %119 = vdwg.mxu0
    %v120 = vmax.f32 %v115, 0.0
    %v121 = vpack.c.bf16 %v120, %v120
    %v122 = vld [vmem:[#allocation7] sm:$0xff]
    %v123 = vld [vmem:[#allocation7 + $0x8] sm:$0xff]
    %v124 = vld [vmem:[#allocation7 + $0x10] sm:$0xff]
    %v125 = vld [vmem:[#allocation7 + $0x18] sm:$0xff]
    %v126 = vpack.c.bf16 %v123, %v122
    %v127 = vpack.c.bf16 %v125, %v124
    %v128 = vld [vmem:[%s4] sm:$0x1]
    %v130 = vlaneseq
    %v131 = vshrl.u32 %v130, 7
    %v132 = vsub.s32 0, %v131
    %v133 = vrot.slane %v128, %v132
    %v136 = vsel %vm76, %v121, 0
    %138 = vmatprep.subr.bf16.mxu0 0
    %139 = vmatpush1.bf16.msra.mxu0 %v126
    %140 = vmatprep.subr.bf16.mxu0 0
    %141 = vmatpush1.bf16.msra.mxu0 %v127
    %142 = vmatprep.subr.bf16.mxu0 0
    %143 = vmatpush1.bf16.msra.mxu0 0
    %144 = vmatprep.subr.bf16.mxu0 0
    %145 = vmatpush1.bf16.msra.mxu0 0
    %146 = vmatprep.subr.bf16.mxu0 0
    %147 = vmatpush1.bf16.msra.mxu0 0
    %148 = vmatprep.subr.bf16.mxu0 0
    %149 = vmatpush1.bf16.msra.mxu0 0
    %150 = vmatprep.subr.bf16.mxu0 0
    %151 = vmatpush1.bf16.msra.mxu0 0
    %152 = vmatprep.subr.bf16.mxu0 0
    %153 = vmatpush1.bf16.msra.mxu0 0
    %154 = vmatprep.subr.bf16.mxu0 0
    %155 = vmatpush1.bf16.msra.mxu0 0
    %156 = vmatprep.subr.bf16.mxu0 0
    %157 = vmatpush1.bf16.msra.mxu0 0
    %158 = vmatprep.subr.bf16.mxu0 0
    %159 = vmatpush1.bf16.msra.mxu0 0
    %160 = vmatprep.subr.bf16.mxu0 0
    %161 = vmatpush1.bf16.msra.mxu0 0
    %162 = vmatprep.subr.bf16.mxu0 0
    %163 = vmatpush1.bf16.msra.mxu0 0
    %164 = vmatprep.subr.bf16.mxu0 0
    %165 = vmatpush1.bf16.msra.mxu0 0
    %166 = vmatprep.subr.bf16.mxu0 0
    %167 = vmatpush1.bf16.msra.mxu0 0
    %168 = vmatprep.subr.bf16.mxu0 0
    %169 = vmatpush1.bf16.msra.mxu0 0
    %170 = vmatprep.mubr.bf16.mxu0 0
    %171 = vmatmul.mubr.bf16.gmra.mrb[0].mxu0 %v136
    %v172 = vpop.f32.mrb[0].mxu0
    %v173 = vadd.f32 %v133, %v172
    %v174 = vpop.f32.mrb[0].mxu0
    %v175 = vpop.f32.mrb[0].mxu0
    %v176 = vpop.f32.mrb[0].mxu0
    %177 = vdwg.mxu0
    %v178 = vmax.f32 %v173, 0.0
    %180 = vrot.lane.b32.xlu0 %v178, 1
    %v181 = vpop.permute.xlu0 %180
    %v183 = vsub.f32 %v178, %v181
    %v184 = vmax.f32 %v183, 0.0
    %v185 = vand.u32 2147483647, %v183
    %v186 = vsub.f32 0.0, %v185
    %v187 = vmul.f32 %v186, 1.442695
    %v188 = vpow.pop %v187
    %v189 = vadd.f32 %v188, 1.0
    %v190 = vlog2.pop %v189
    %v191 = vmul.f32 %v190, 0.6931472
    %v192 = vadd.f32 %v184, %v191
    %v193 = vsub.f32 %v192, %v183
    %v194 = vlaneseq
    %v195 = vand.u32 %v194, 127
    %vm196 = vcmp.eq.s32.totalorder %v195, 0
    %v197 = vsub.f32 0.0, %v192
    %vm198 = vcmp.eq.s32.totalorder %v195, 1
    %v199 = vsub.f32 0.0, %v193
    %201 = vset.pattern.permute.xlu0 1
    %202 = vperm.xlu0 %201, %v199
    %v203 = vpop.permute.xlu0 %202
    %v205 = vsel %vm198, %v203, 0.0
    %207 = vset.pattern.permute.xlu0 1
    %208 = vperm.xlu0 %207, %v197
    %v209 = vpop.permute.xlu0 %208
    %v211 = vsel %vm196, %v209, %v205
    %212 = vst [vmem:[#allocation8] sm:$0xff] %v211
    // Predicated region
    $region34: #{tpu_custom_call.1} parent=1 // pred_check
      _
    $region35: #{tpu_custom_call.1} parent=1 // pred_check_branch
      %214 = sbr.rel (0) target = $region37
    $region36: #{tpu_custom_call.1} parent=1 // pred_region
      %s216 = ssub.s32 128, 128
      %217 = vsyncadd [#allocation4], %s216
      %s219 = sshll.u32 [#allocation8], 4
      %s220 = int_to_ptr.vmem [resolvable:$true] %s219
      %222 = dma.vmem_to_hbm [thread:$0]  %s220, 128, %s5, [#allocation4]
    $region37: #{tpu_custom_call.1} parent=1 // pred_fallthru
      _
    // Predicated region
    $region38: #{tpu_custom_call.1} parent=1 // pred_check
      _
    $region39: #{tpu_custom_call.1} parent=1 // pred_check_branch
      %224 = sbr.rel (0) target = $region41
    $region40: #{tpu_custom_call.1} parent=1 // pred_region
      %225 = dma.done [#allocation4], 128
    $region41: #{tpu_custom_call.1} parent=1 // pred_fallthru
      _
    %226 = vsyncpa [#allocation3], 1
    %227 = vsyncpa [#allocation6], 1
    %228 = vsyncpa [#allocation4], 1

</llo_original>
